<compile_context>
chip_gen: v7x
topology: tpu7x:2x2x1
jax: 0.10.0
libtpu: 0.0.40
codegen_flags: <defaults>
</compile_context>

<pallas_src>
import functools

import jax
import jax.numpy as jnp
from jax.experimental import pallas as pl
from jax.experimental.pallas import tpu as pltpu


def _round_up(x, m):
    return -(-x // m) * m


def _ls_sce_kernel(logits_ref, label_ref, out_ref, acc_sc, cnt_sc, *,
                   lb_pos, lb_neg, lb_ignore, hw, tile_hw, tiles_per_split):
    t = pl.program_id(2)

    @pl.when(t == 0)
    def _():
        acc_sc[...] = jnp.zeros_like(acc_sc)
        cnt_sc[...] = jnp.zeros_like(cnt_sc)

    x = logits_ref[0].astype(jnp.float32)          # (C, T): classes on sublanes
    lab = label_ref[0]                             # (1, T) int32
    C, T = x.shape

    # Numerically stable log-sum-exp over the class (sublane) axis, per pixel.
    m = jnp.max(x, axis=0, keepdims=True)                               # (1, T)
    lse = m + jnp.log(jnp.sum(jnp.exp(x - m), axis=0, keepdims=True))   # (1, T)

    # Fused smoothed cross-entropy (single weighted class reduction):
    #   -sum_c smooth[c] * (x[c] - lse)
    #     = (lb_pos + (C-1)*lb_neg) * lse - sum_c w[c]*x[c],
    #   where w[c] = lb_pos if c == label else lb_neg.
    cls = jax.lax.broadcasted_iota(jnp.int32, (C, T), 0)                # (C, T)
    lab_clean = jnp.where(lab == lb_ignore, 0, lab)                     # (1, T)
    w = jnp.where(cls == lab_clean, lb_pos, lb_neg)                     # (C, T)
    s = jnp.sum(w * x, axis=0, keepdims=True)                           # (1, T)
    coeff = lb_pos + (C - 1) * lb_neg
    per_pix = coeff * lse - s                                           # (1, T)

    # Valid = not ignore_index AND inside the real spatial extent (handles both
    # the ragged last tile and clamped/duplicated padding tiles of a split).
    t_global = pl.program_id(1) * tiles_per_split + t
    pix = jax.lax.broadcasted_iota(jnp.int32, (1, T), 1) + t_global * tile_hw
    valid = jnp.logical_and(lab != lb_ignore, pix < hw)                 # (1, T)

    acc_sc[...] += jnp.where(valid, per_pix, 0.0)
    cnt_sc[...] += jnp.where(valid, 1.0, 0.0)

    @pl.when(t == pl.num_programs(2) - 1)
    def _():
        # One cross-lane reduction per (image, split), outside the hot loop.
        loss_sum = jnp.sum(acc_sc[...], axis=-1, keepdims=True)         # (1, 1)
        cnt_sum = jnp.sum(cnt_sc[...], axis=-1, keepdims=True)          # (1, 1)
        lane = jax.lax.broadcasted_iota(jnp.int32, (1, 128), 1)
        packed = jnp.where(lane == 0, loss_sum,
                           jnp.where(lane == 1, cnt_sum, 0.0))          # (1, 128)
        out_ref[...] = packed.reshape(out_ref.shape)


def label_smooth_softmax_ce(logits, label, *, lb_pos=0.9, lb_neg=0.005,
                            lb_ignore=255, tile_hw=None, spatial_splits=None):
    """logits: (N, C, H, W) float32/bfloat16; label: (N, H, W) int.

    Returns the scalar label-smoothed CE loss, matching
    LabelSmoothSoftmaxCE.forward with reduction='mean'.
    (All-ignored input yields 0/0 = NaN, same as the PyTorch module.)
    """
    # TODO(synk): only reduction='mean' (the module default) is implemented.
    N, C, H, W = logits.shape
    HW = H * W

    # Free, contiguous reshapes — no transpose / extra HBM pass.
    x3d = logits.reshape(N, C, HW)
    l3d = label.reshape(N, 1, HW).astype(jnp.int32)

    # ---- dtype / padding aware VMEM accounting -----------------------------
    itemsize = jnp.dtype(logits.dtype).itemsize
    # Sub-32-bit dtypes pack along sublanes: f32 tiles are (8,128), bf16 (16,128).
    sub_mult = 8 * max(1, 4 // itemsize)
    pad_C = _round_up(C, sub_mult)
    # Per-lane bytes: double-buffered logits block + double-buffered int32
    # label block (padded to 8 sublanes) + two single-buffered f32 scratch
    # rows (each padded to 8 sublanes).
    per_lane = 2 * pad_C * itemsize + 2 * 8 * 4 + 2 * 8 * 4

    # ---- generation-aware VMEM budget ---------------------------------------
    try:
        phys_vmem = int(pltpu.get_tpu_info().vmem_capacity_bytes)
    except Exception:
        phys_vmem = 64 << 20  # conservative (v7x-sized) fallback
    limit_cap = (100 << 20) if phys_vmem >= (100 << 20) else (48 << 20)

    if tile_hw is None:
        budget = limit_cap - (6 << 20)        # headroom for outputs/internals
        cap = max(128, (budget // per_lane) // 128 * 128)
        # TODO(synk): vocab-sized C needs a class-tiled online-logsumexp grid
        # axis; for now only the spatial tile is clamped (minimum 128 lanes).
        tile_hw = HW if HW <= cap else cap
    assert tile_hw == HW or tile_hw % 128 == 0, (
        "tile_hw must be a multiple of 128 or equal to H*W")

    num_t = pl.cdiv(HW, tile_hw)
    if spatial_splits is None:
        # Extra parallel axis helps balance across cores when N alone is small.
        spatial_splits = 2 if (num_t >= 2 and N < 4) else 1
    spatial_splits = max(1, min(spatial_splits, num_t))
    tiles_per_split = pl.cdiv(num_t, spatial_splits)

    vmem_need = per_lane * tile_hw + (4 << 20)
    vmem_limit = int(min(max(vmem_need, 32 << 20), limit_cap))

    kernel = functools.partial(
        _ls_sce_kernel, lb_pos=float(lb_pos), lb_neg=float(lb_neg),
        lb_ignore=int(lb_ignore), hw=HW, tile_hw=tile_hw,
        tiles_per_split=tiles_per_split)

    def _tile_idx(s, t):
        # Padded (s, t) combos re-read the last real tile; their lanes are
        # fully masked out by the pix < HW check in the kernel.
        return jnp.minimum(s * tiles_per_split + t, num_t - 1)

    partials = pl.pallas_call(
        kernel,
        out_shape=jax.ShapeDtypeStruct((N, spatial_splits, 128), jnp.float32),
        grid_spec=pltpu.PrefetchScalarGridSpec(
            num_scalar_prefetch=0,
            grid=(N, spatial_splits, tiles_per_split),
            in_specs=[
                pl.BlockSpec((1, C, tile_hw),
                             lambda n, s, t: (n, 0, _tile_idx(s, t))),
                pl.BlockSpec((1, 1, tile_hw),
                             lambda n, s, t: (n, 0, _tile_idx(s, t))),
            ],
            out_specs=pl.BlockSpec((1, 1, 128), lambda n, s, t: (n, s, 0)),
            scratch_shapes=[
                pltpu.VMEM((1, tile_hw), jnp.float32),   # per-lane loss partials
                pltpu.VMEM((1, tile_hw), jnp.float32),   # per-lane valid counts
            ],
        ),
        compiler_params=pltpu.CompilerParams(
            # TODO(synk): on v7x, pltpu.CORE_PARALLEL on the leading axes would
            # shard the two TensorCores explicitly; plain "parallel" is used
            # here so the same code compiles on v5e/v6e/v7x.
            dimension_semantics=("parallel", "parallel", "arbitrary"),
            vmem_limit_bytes=vmem_limit),
    )(x3d, l3d)

    # reduction='mean': -sum(logs * smoothed) / n_valid.
    return jnp.sum(partials[:, :, 0]) / jnp.sum(partials[:, :, 1])


def _reference(logits, label, lb_pos=0.9, lb_neg=0.005, lb_ignore=255):
    """Pure-JAX mirror of the PyTorch forward (reduction='mean')."""
    C = logits.shape[1]
    logs = jax.nn.log_softmax(logits, axis=1)
    ignore = label == lb_ignore
    n_valid = jnp.sum(~ignore).astype(jnp.float32)
    lab_clean = jnp.where(ignore, 0, label)
    one_hot = jax.nn.one_hot(lab_clean, C, axis=1, dtype=jnp.float32)
    smooth = lb_pos * one_hot + lb_neg * (1.0 - one_hot)
    smooth = jnp.where(ignore[:, None, :, :], 0.0, smooth)
    return -jnp.sum(logs * smooth) / n_valid


if __name__ == "__main__":
    key = jax.random.PRNGKey(0)

    # Test 1: module-default small shape, single spatial tile per image.
    N, C, H, W = 2, 4, 16, 16
    k1, k2 = jax.random.split(key)
    logits = jax.random.normal(k1, (N, C, H, W), dtype=jnp.float32)
    label = jax.random.randint(k2, (N, H, W), 0, C).astype(jnp.int32)
    label = label.at[0, 0, :4].set(255)   # exercise ignore_index path

    loss = jax.block_until_ready(label_smooth_softmax_ce(logits, label))
    ref = _reference(logits, label)
    assert jnp.allclose(loss, ref, rtol=1e-5, atol=1e-5), (float(loss), float(ref))

    # Test 2: spatial size not a multiple of 128, multi-tile grid with a ragged
    # last tile AND a forced spatial split that needs clamped padding tiles.
    N2, C2, H2, W2 = 1, 3, 20, 20
    k3, k4 = jax.random.split(k1)
    logits2 = jax.random.normal(k3, (N2, C2, H2, W2), dtype=jnp.float32)
    label2 = jax.random.randint(k4, (N2, H2, W2), 0, C2).astype(jnp.int32)
    label2 = label2.at[0, 3, :5].set(255)

    loss2 = jax.block_until_ready(
        label_smooth_softmax_ce(logits2, label2, tile_hw=128, spatial_splits=3))
    ref2 = _reference(logits2, label2)
    assert jnp.allclose(loss2, ref2, rtol=1e-5, atol=1e-5), (float(loss2), float(ref2))

    # Test 3: bf16 logits path (dtype-aware tiling; LSE math stays f32).
    N3, C3, H3, W3 = 2, 5, 12, 12
    k5, k6 = jax.random.split(k3)
    logits3 = jax.random.normal(k5, (N3, C3, H3, W3), dtype=jnp.float32)
    logits3_bf16 = logits3.astype(jnp.bfloat16)
    label3 = jax.random.randint(k6, (N3, H3, W3), 0, C3).astype(jnp.int32)

    loss3 = jax.block_until_ready(label_smooth_softmax_ce(logits3_bf16, label3))
    ref3 = _reference(logits3_bf16.astype(jnp.float32), label3)
    assert jnp.allclose(loss3, ref3, rtol=1e-4, atol=1e-4), (float(loss3), float(ref3))

    print("KERNEL_OK")
</pallas_src>

<mosaic_0001>
module attributes {stable_mosaic.version = 11 : i64} {
  func.func @_ls_sce_kernel(%arg0: i32, %arg1: i32, %arg2: i32, %arg3: memref<1x4x256xf32, #tpu.memory_space<vmem>>, %arg4: memref<1x1x256xi32, #tpu.memory_space<vmem>>, %arg5: memref<1x1x128xf32, #tpu.memory_space<vmem>>, %arg6: memref<1x256xf32, #tpu.memory_space<vmem>>, %arg7: memref<1x256xf32, #tpu.memory_space<vmem>>) attributes {dimension_semantics = [#tpu.dimension_semantics<parallel>, #tpu.dimension_semantics<parallel>, #tpu.dimension_semantics<arbitrary>], iteration_bounds = array<i64: 2, 1, 1>, scalar_prefetch = 0 : i64, scratch_operands = 2 : i64, tpu.core_type = #tpu.core_type<tc>, window_params = [{transform_indices = @transform_0, window_bounds = array<i64: 1, 4, 256>}, {transform_indices = @transform_1, window_bounds = array<i64: 1, 1, 256>}, {transform_indices = @transform_2, window_bounds = array<i64: 1, 1, 128>}]} {
    %c0_i32 = arith.constant 0 : i32
    %0 = arith.cmpi eq, %arg2, %c0_i32 : i32
    %1 = arith.extui %0 : i1 to i32
    %c0_i32_0 = arith.constant 0 : i32
    %2 = arith.cmpi ne, %1, %c0_i32_0 : i32
    scf.if %2 {
      %cst_27 = arith.constant 0.000000e+00 : f32
      %57 = vector.broadcast %cst_27 : f32 to vector<1x256xf32>
      %c0_28 = arith.constant 0 : index
      %c0_29 = arith.constant 0 : index
      %58 = vector.load %arg6[%c0_28, %c0_29] : memref<1x256xf32, #tpu.memory_space<vmem>>, vector<1x256xf32>
      tpu.vector_store %arg6[%c0_28, %c0_29], %57 {strides = array<i32>} : memref<1x256xf32, #tpu.memory_space<vmem>>, vector<1x256xf32>,
      %cst_30 = arith.constant 0.000000e+00 : f32
      %59 = vector.broadcast %cst_30 : f32 to vector<1x256xf32>
      %c0_31 = arith.constant 0 : index
      %c0_32 = arith.constant 0 : index
      %60 = vector.load %arg7[%c0_31, %c0_32] : memref<1x256xf32, #tpu.memory_space<vmem>>, vector<1x256xf32>
      tpu.vector_store %arg7[%c0_31, %c0_32], %59 {strides = array<i32>} : memref<1x256xf32, #tpu.memory_space<vmem>>, vector<1x256xf32>,
    } else {
    }
    %c0 = arith.constant 0 : index
    %c0_1 = arith.constant 0 : index
    %c0_2 = arith.constant 0 : index
    %3 = vector.load %arg3[%c0, %c0_1, %c0_2] : memref<1x4x256xf32, #tpu.memory_space<vmem>>, vector<1x4x256xf32>
    %4 = vector.shape_cast %3 : vector<1x4x256xf32> to vector<4x256xf32>
    %c0_3 = arith.constant 0 : index
    %c0_4 = arith.constant 0 : index
    %c0_5 = arith.constant 0 : index
    %5 = vector.load %arg4[%c0_3, %c0_4, %c0_5] : memref<1x1x256xi32, #tpu.memory_space<vmem>>, vector<1x1x256xi32>
    %6 = vector.shape_cast %5 : vector<1x1x256xi32> to vector<1x256xi32>
    %cst = arith.constant dense<0xFF800000> : vector<256xf32>
    %7 = vector.multi_reduction <maximumf>, %4, %cst [0] : vector<4x256xf32> to vector<256xf32>
    %8 = vector.shape_cast %7 : vector<256xf32> to vector<1x256xf32>
    %9 = vector.broadcast %8 : vector<1x256xf32> to vector<4x256xf32>
    %10 = arith.subf %4, %9 : vector<4x256xf32>
    %11 = math.exp %10 : vector<4x256xf32>
    %cst_6 = arith.constant dense<0.000000e+00> : vector<256xf32>
    %12 = vector.multi_reduction <add>, %11, %cst_6 [0] : vector<4x256xf32> to vector<256xf32>
    %13 = vector.shape_cast %12 : vector<256xf32> to vector<1x256xf32>
    %14 = math.log %13 : vector<1x256xf32>
    %15 = arith.addf %8, %14 : vector<1x256xf32>
    %16 = tpu.iota {dimensions = array<i32: 0>} : vector<4x256xi32>
    %c255_i32 = arith.constant 255 : i32
    %17 = vector.broadcast %c255_i32 : i32 to vector<1x256xi32>
    %18 = arith.cmpi eq, %6, %17 : vector<1x256xi32>
    %c0_i32_7 = arith.constant 0 : i32
    %19 = vector.broadcast %c0_i32_7 : i32 to vector<1x256xi32>
    %20 = arith.select %18, %19, %6 : vector<1x256xi1>, vector<1x256xi32>
    %21 = vector.broadcast %20 : vector<1x256xi32> to vector<4x256xi32>
    %22 = arith.cmpi eq, %16, %21 : vector<4x256xi32>
    %cst_8 = arith.constant 0.899999976 : f32
    %cst_9 = arith.constant 5.000000e-03 : f32
    %23 = vector.broadcast %cst_8 : f32 to vector<4x256xf32>
    %24 = vector.broadcast %cst_9 : f32 to vector<4x256xf32>
    %25 = arith.select %22, %23, %24 : vector<4x256xi1>, vector<4x256xf32>
    %26 = arith.mulf %25, %4 : vector<4x256xf32>
    %cst_10 = arith.constant dense<0.000000e+00> : vector<256xf32>
    %27 = vector.multi_reduction <add>, %26, %cst_10 [0] : vector<4x256xf32> to vector<256xf32>
    %28 = vector.shape_cast %27 : vector<256xf32> to vector<1x256xf32>
    %cst_11 = arith.constant 9.150000e-01 : f32
    %29 = vector.broadcast %cst_11 : f32 to vector<1x256xf32>
    %30 = arith.mulf %29, %15 : vector<1x256xf32>
    %31 = arith.subf %30, %28 : vector<1x256xf32>
    %c1_i32 = arith.constant 1 : i32
    %32 = arith.muli %arg1, %c1_i32 : i32
    %33 = arith.addi %32, %arg2 : i32
    %34 = tpu.iota {dimensions = array<i32: 1>} : vector<1x256xi32>
    %c256_i32 = arith.constant 256 : i32
    %35 = arith.muli %33, %c256_i32 : i32
    %36 = vector.broadcast %35 : i32 to vector<1x256xi32>
    %37 = arith.addi %34, %36 : vector<1x256xi32>
    %c255_i32_12 = arith.constant 255 : i32
    %38 = vector.broadcast %c255_i32_12 : i32 to vector<1x256xi32>
    %39 = arith.cmpi ne, %6, %38 : vector<1x256xi32>
    %c256_i32_13 = arith.constant 256 : i32
    %40 = vector.broadcast %c256_i32_13 : i32 to vector<1x256xi32>
    %41 = arith.cmpi slt, %37, %40 : vector<1x256xi32>
    %42 = arith.andi %39, %41 : vector<1x256xi1>
    %c0_14 = arith.constant 0 : index
    %c0_15 = arith.constant 0 : index
    %43 = vector.load %arg6[%c0_14, %c0_15] : memref<1x256xf32, #tpu.memory_space<vmem>>, vector<1x256xf32>
    %cst_16 = arith.constant 0.000000e+00 : f32
    %44 = vector.broadcast %cst_16 : f32 to vector<1x256xf32>
    %45 = arith.select %42, %31, %44 : vector<1x256xi1>, vector<1x256xf32>
    %46 = arith.addf %43, %45 : vector<1x256xf32>
    %c0_17 = arith.constant 0 : index
    %c0_18 = arith.constant 0 : index
    %47 = vector.load %arg6[%c0_17, %c0_18] : memref<1x256xf32, #tpu.memory_space<vmem>>, vector<1x256xf32>
    tpu.vector_store %arg6[%c0_17, %c0_18], %46 {strides = array<i32>} : memref<1x256xf32, #tpu.memory_space<vmem>>, vector<1x256xf32>,
    %c0_19 = arith.constant 0 : index
    %c0_20 = arith.constant 0 : index
    %48 = vector.load %arg7[%c0_19, %c0_20] : memref<1x256xf32, #tpu.memory_space<vmem>>, vector<1x256xf32>
    %cst_21 = arith.constant 1.000000e+00 : f32
    %cst_22 = arith.constant 0.000000e+00 : f32
    %49 = vector.broadcast %cst_21 : f32 to vector<1x256xf32>
    %50 = vector.broadcast %cst_22 : f32 to vector<1x256xf32>
    %51 = arith.select %42, %49, %50 : vector<1x256xi1>, vector<1x256xf32>
    %52 = arith.addf %48, %51 : vector<1x256xf32>
    %c0_23 = arith.constant 0 : index
    %c0_24 = arith.constant 0 : index
    %53 = vector.load %arg7[%c0_23, %c0_24] : memref<1x256xf32, #tpu.memory_space<vmem>>, vector<1x256xf32>
    tpu.vector_store %arg7[%c0_23, %c0_24], %52 {strides = array<i32>} : memref<1x256xf32, #tpu.memory_space<vmem>>, vector<1x256xf32>,
    %c0_i32_25 = arith.constant 0 : i32
    %54 = arith.cmpi eq, %arg2, %c0_i32_25 : i32
    %55 = arith.extui %54 : i1 to i32
    %c0_i32_26 = arith.constant 0 : i32
    %56 = arith.cmpi ne, %55, %c0_i32_26 : i32
    scf.if %56 {
      %c0_27 = arith.constant 0 : index
      %c0_28 = arith.constant 0 : index
      %57 = vector.load %arg6[%c0_27, %c0_28] : memref<1x256xf32, #tpu.memory_space<vmem>>, vector<1x256xf32>
      %cst_29 = arith.constant dense<0.000000e+00> : vector<1xf32>
      %58 = vector.multi_reduction <add>, %57, %cst_29 [1] : vector<1x256xf32> to vector<1xf32>
      %59 = vector.shape_cast %58 : vector<1xf32> to vector<1x1xf32>
      %c0_30 = arith.constant 0 : index
      %c0_31 = arith.constant 0 : index
      %60 = vector.load %arg7[%c0_30, %c0_31] : memref<1x256xf32, #tpu.memory_space<vmem>>, vector<1x256xf32>
      %cst_32 = arith.constant dense<0.000000e+00> : vector<1xf32>
      %61 = vector.multi_reduction <add>, %60, %cst_32 [1] : vector<1x256xf32> to vector<1xf32>
      %62 = vector.shape_cast %61 : vector<1xf32> to vector<1x1xf32>
      %63 = tpu.iota {dimensions = array<i32: 1>} : vector<1x128xi32>
      %c0_i32_33 = arith.constant 0 : i32
      %64 = vector.broadcast %c0_i32_33 : i32 to vector<1x128xi32>
      %65 = arith.cmpi eq, %63, %64 : vector<1x128xi32>
      %c1_i32_34 = arith.constant 1 : i32
      %66 = vector.broadcast %c1_i32_34 : i32 to vector<1x128xi32>
      %67 = arith.cmpi eq, %63, %66 : vector<1x128xi32>
      %cst_35 = arith.constant 0.000000e+00 : f32
      %68 = vector.shape_cast %62 : vector<1x1xf32> to vector<1x1xf32>
      %69 = vector.broadcast %68 : vector<1x1xf32> to vector<1x128xf32>
      %70 = vector.broadcast %cst_35 : f32 to vector<1x128xf32>
      %71 = arith.select %67, %69, %70 : vector<1x128xi1>, vector<1x128xf32>
      %72 = vector.shape_cast %59 : vector<1x1xf32> to vector<1x1xf32>
      %73 = vector.broadcast %72 : vector<1x1xf32> to vector<1x128xf32>
      %74 = arith.select %65, %73, %71 : vector<1x128xi1>, vector<1x128xf32>
      %75 = vector.shape_cast %74 : vector<1x128xf32> to vector<1x1x128xf32>
      %c0_36 = arith.constant 0 : index
      %c0_37 = arith.constant 0 : index
      %c0_38 = arith.constant 0 : index
      %76 = vector.load %arg5[%c0_36, %c0_37, %c0_38] : memref<1x1x128xf32, #tpu.memory_space<vmem>>, vector<1x1x128xf32>
      tpu.vector_store %arg5[%c0_36, %c0_37, %c0_38], %75 {strides = array<i32>} : memref<1x1x128xf32, #tpu.memory_space<vmem>>, vector<1x1x128xf32>,
    } else {
    }
    return
  }
  func.func @transform_0(%arg0: i32, %arg1: i32, %arg2: i32) -> (i32, i32, i32) {
    %c1_i32 = arith.constant 1 : i32
    %0 = arith.muli %arg1, %c1_i32 : i32
    %1 = arith.addi %0, %arg2 : i32
    %c0_i32 = arith.constant 0 : i32
    %2 = arith.minsi %1, %c0_i32 : i32
    %c0_i32_0 = arith.constant 0 : i32
    %c0_i32_1 = arith.constant 0 : i32
    return %arg0, %c0_i32_0, %2 : i32, i32, i32
  }
  func.func @transform_1(%arg0: i32, %arg1: i32, %arg2: i32) -> (i32, i32, i32) {
    %c1_i32 = arith.constant 1 : i32
    %0 = arith.muli %arg1, %c1_i32 : i32
    %1 = arith.addi %0, %arg2 : i32
    %c0_i32 = arith.constant 0 : i32
    %2 = arith.minsi %1, %c0_i32 : i32
    %c0_i32_0 = arith.constant 0 : i32
    %c0_i32_1 = arith.constant 0 : i32
    return %arg0, %c0_i32_0, %2 : i32, i32, i32
  }
  func.func @transform_2(%arg0: i32, %arg1: i32, %arg2: i32) -> (i32, i32, i32) {
    %c0_i32 = arith.constant 0 : i32
    %c0_i32_0 = arith.constant 0 : i32
    return %arg0, %arg1, %c0_i32 : i32, i32, i32
  }
}

</mosaic_0001>

<llo_original>
// kernel: tpu_custom_call.1
$region0: #{tpu_custom_call.1}
  #allocation0 [shape = 'u32[]', space=smem, size = 0x4, offset = 0x4, fixed_abs, tag = 'smem constant byte address 0x4 - core index']
  #allocation1 [shape = 'u32[144,128]{1,0:T(1,128)}', space=vmem, size = 0x12000, scoped, tag = 'internal scratch']
  #allocation2 [shape = 'f32[1,256]{1,0:T(1,128)}', space=vmem, size = 0x400, scoped, tag = 'scratch operand']
  #allocation3 [shape = 'f32[1,256]{1,0:T(1,128)}', space=vmem, size = 0x400, scoped, tag = 'scratch operand']
  %s0 = inlined_call_operand.hbm [shape: f32[2,4,256], index: 0, kind: input, shape index: {}]
  %s1 = inlined_call_operand.hbm [shape: s32[2,1,256], index: 1, kind: input, shape index: {}]
  %s2 = inlined_call_operand.hbm [shape: f32[2,1,128], index: 2, kind: output, shape index: {}]
  %s3 = sld [smem:[#allocation0]]
  $region57: #{tpu_custom_call.1} parent=0
    _
  %s5 = ssub.s32 1, %s3
  %s6 = scalar_select 0, %s5, %s3
  $region1: #{tpu_custom_call.1} parent=0
    #allocation4 [shape = 'u8[8192]{0}', space=vmem, size = 0x2000, scoped, tag = 'input window, operand 0']
    #allocation5 [shape = 's32[2]{0}', space=sflag, size = 0x8, scoped, tag = 'scoped memory for tpu_custom_call.1']
    #allocation6 [shape = 's32[2]{0}', space=sflag, size = 0x8, scoped, tag = 'scoped memory for tpu_custom_call.1']
    #allocation7 [shape = 'u8[2048]{0}', space=vmem, size = 0x800, scoped, tag = 'input window, operand 1']
    #allocation8 [shape = 's32[2]{0}', space=sflag, size = 0x8, scoped, tag = 'scoped memory for tpu_custom_call.1']
    #allocation9 [shape = 'u8[1024]{0}', space=vmem, size = 0x400, scoped, tag = 'output window, operand 0']
    %7 = vsyncpa [#allocation5], 0
    %s8 = scalar_lea.sflag [#allocation5], 1
    %9 = vsyncpa %s8, 0
    %10 = vsyncpa [#allocation8], 0
    %s11 = scalar_lea.sflag [#allocation8], 1
    %12 = vsyncpa %s11, 0
    %13 = vsyncpa [#allocation6], 0
    %s14 = scalar_lea.sflag [#allocation6], 1
    %15 = vsyncpa %s14, 0
    loop: start=0, step=1, limit=4
    $region2: #{tpu_custom_call.1} parent=1 // loop_pre_header
      _
    $region3: #{tpu_custom_call.1} parent=1 // loop_header
      %s17 = sphi 0, %s21
      %p18 = scmp.ge.s32.totalorder %s17, 4
      %s24 = sphi 0, %s43
      %s25 = sphi 0, %s39
      %s26 = sphi 0, %s35
      %s27 = sphi 0, %s24
      %s28 = sphi 0, %s25
      %s29 = sphi 0, %s26
      %s30 = sphi 0, %s27
      %s31 = sphi 0, %s28
      %s32 = sphi 0, %s29
      %s54 = sphi 0, %s56
      %s57 = sphi 0, %s54
      %s58 = sphi 0, %s57
      %s74 = sphi 0, %s58
      %s88 = sphi 0, %s90
      %s91 = sphi 0, %s88
      %s92 = sphi 0, %s91
      %s108 = sphi 0, %s92
      %s116 = sphi 0, %s118
      %s119 = sphi 0, %s116
      %s120 = sphi 0, %s119
      %s136 = sphi 0, %s120
    $region4: #{tpu_custom_call.1} parent=1 // loop_header_branch
      %20 = sbr.rel (%p18) target = $region8
    $region5: #{tpu_custom_call.1} parent=1 // loop_body
      %s22 = ssub.s32 %s17, 1
      %s23 = ssub.s32 %s17, 2
      %s33 = sadd.s32 1, %s26
      %p34 = scmp.ge.s32.totalorder %s33, 1
      %s35 = scalar_select %p34, 0, %s33
      %s36 = sadd.s32 1, %s25
      %s37 = scalar_select %p34, %s36, %s25
      %p38 = scmp.ge.s32.totalorder %s37, 1
      %s39 = scalar_select %p38, 0, %s37
      %s40 = sadd.s32 1, %s24
      %s41 = scalar_select %p38, %s40, %s24
      %p42 = scmp.ge.s32.totalorder %s41, 2
      %s43 = scalar_select %p42, 0, %s41
      %s44 = sadd.s32 %s25, %s26
      %p45 = scmp.lt.s32.totalorder %s44, 0
      %s46 = scalar_select %p45, %s44, 0
      %s47 = sadd.s32 %s39, %s35
      %p48 = scmp.lt.s32.totalorder %s47, 0
      %s49 = scalar_select %p48, %s47, 0
      %s50 = ssub.s32 %s24, %s43
      %s51 = ssub.s32 %s46, %s49
      %s52 = sor.u32 %s50, %s51
      %p53 = scmp.eq.s32.totalorder %s52, 0
      %s55 = sadd.s32 %s54, 1
      %s56 = scalar_select %p53, %s54, %s55
      %p59 = pneg %p53
      %p60 = scmp.eq.s32.totalorder %s17, 1
      %p61 = por %p59, %p60
      %p62 = scmp.ne.s32.totalorder %s54, %s57
      %p63 = scmp.eq.s32.totalorder %s17, 0
      %p64 = por %p62, %p63
      %p65 = scmp.ne.s32.totalorder %s54, %s57
      %p66 = scmp.eq.s32.totalorder %s22, 1
      %p67 = por %p65, %p66
      %p68 = scmp.ne.s32.totalorder %s57, %s58
      %p69 = scmp.eq.s32.totalorder %s22, 0
      %p70 = por %p68, %p69
      %p71 = scmp.ne.s32.totalorder %s57, %s58
      %p72 = scmp.eq.s32.totalorder %s23, 1
      %p73 = por %p71, %p72
      %p75 = scmp.ne.s32.totalorder %s58, %s74
      %p76 = scmp.eq.s32.totalorder %s23, 0
      %p77 = por %p75, %p76
      %s78 = sadd.s32 %s25, %s26
      %p79 = scmp.lt.s32.totalorder %s78, 0
      %s80 = scalar_select %p79, %s78, 0
      %s81 = sadd.s32 %s39, %s35
      %p82 = scmp.lt.s32.totalorder %s81, 0
      %s83 = scalar_select %p82, %s81, 0
      %s84 = ssub.s32 %s24, %s43
      %s85 = ssub.s32 %s80, %s83
      %s86 = sor.u32 %s84, %s85
      %p87 = scmp.eq.s32.totalorder %s86, 0
      %s89 = sadd.s32 %s88, 1
      %s90 = scalar_select %p87, %s88, %s89
      %p93 = pneg %p87
      %p94 = scmp.eq.s32.totalorder %s17, 1
      %p95 = por %p93, %p94
      %p96 = scmp.ne.s32.totalorder %s88, %s91
      %p97 = scmp.eq.s32.totalorder %s17, 0
      %p98 = por %p96, %p97
      %p99 = scmp.ne.s32.totalorder %s88, %s91
      %p100 = scmp.eq.s32.totalorder %s22, 1
      %p101 = por %p99, %p100
      %p102 = scmp.ne.s32.totalorder %s91, %s92
      %p103 = scmp.eq.s32.totalorder %s22, 0
      %p104 = por %p102, %p103
      %p105 = scmp.ne.s32.totalorder %s91, %s92
      %p106 = scmp.eq.s32.totalorder %s23, 1
      %p107 = por %p105, %p106
      %p109 = scmp.ne.s32.totalorder %s92, %s108
      %p110 = scmp.eq.s32.totalorder %s23, 0
      %p111 = por %p109, %p110
      %s112 = ssub.s32 %s24, %s43
      %s113 = ssub.s32 %s25, %s39
      %s114 = sor.u32 %s112, %s113
      %p115 = scmp.eq.s32.totalorder %s114, 0
      %s117 = sadd.s32 %s116, 1
      %s118 = scalar_select %p115, %s116, %s117
      %p121 = pneg %p115
      %p122 = scmp.eq.s32.totalorder %s17, 1
      %p123 = por %p121, %p122
      %p124 = scmp.ne.s32.totalorder %s116, %s119
      %p125 = scmp.eq.s32.totalorder %s17, 0
      %p126 = por %p124, %p125
      %p127 = scmp.ne.s32.totalorder %s116, %s119
      %p128 = scmp.eq.s32.totalorder %s22, 1
      %p129 = por %p127, %p128
      %p130 = scmp.ne.s32.totalorder %s119, %s120
      %p131 = scmp.eq.s32.totalorder %s22, 0
      %p132 = por %p130, %p131
      %p133 = scmp.ne.s32.totalorder %s119, %s120
      %p134 = scmp.eq.s32.totalorder %s23, 1
      %p135 = por %p133, %p134
      %p137 = scmp.ne.s32.totalorder %s120, %s136
      %p138 = scmp.eq.s32.totalorder %s23, 0
      %p139 = por %p137, %p138
      %p140 = scmp.le.s32.totalorder 1, %s17
      %p141 = scmp.lt.s32.totalorder %s17, 3
      %p142 = pnand %p140, %p141
      %p143 = pneg %p142
      // Predicated region
      $region9: #{tpu_custom_call.1} parent=5 // pred_check
        _
      $region10: #{tpu_custom_call.1} parent=5 // pred_check_branch
        %145 = sbr.rel (%p142) target = $region12
      $region11: #{tpu_custom_call.1} parent=5 // pred_region
        %s146 = ssub.s32 %s17, 1
      $region12: #{tpu_custom_call.1} parent=5 // pred_fallthru
        _
      %p147 = scmp.lt.s32.totalorder %s17, 2
      // Predicated region
      $region13: #{tpu_custom_call.1} parent=5 // pred_check
        %p148 = pneg %p147
      $region14: #{tpu_custom_call.1} parent=5 // pred_check_branch
        %150 = sbr.rel (%p148) target = $region16
      $region15: #{tpu_custom_call.1} parent=5 // pred_region
        // Predicated region
        $region17: #{tpu_custom_call.1} parent=15 // pred_check
          %p151 = pneg %p64
        $region18: #{tpu_custom_call.1} parent=15 // pred_check_branch
          %153 = sbr.rel (%p151) target = $region20
        $region19: #{tpu_custom_call.1} parent=15 // pred_region
          %s154 = sand.u32 %s54, 1
          %s155 = scalar_lea.sflag [#allocation5], %s154
          %s156 = sand.u32 %s54, 1
          %s157 = smul.addr %s156, 8
          %s158 = scalar_lea.vmem [#allocation4], %s157
          %s159 = sadd.s32 %s25, %s26
          %p160 = scmp.lt.s32.totalorder %s159, 0
          %s161 = scalar_select %p160, %s159, 0
          %s162 = smul.u32 2, %s161
          %s164 = ssub.s32 128, 128
          %165 = vsyncadd %s155, %s164
          %s166 = smul.addr %s24, 2
          %s167 = sadd.s32 %s162, %s166
          %s168 = smul.addr %s167, 64
          %s169 = scalar_lea.hbm %s0, %s168
          %s171 = sshll.u32 %s158, 4
          %s172 = int_to_ptr.vmem [resolvable:$true] %s171
          %174 = dma.hbm_to_vmem [thread:$0]  %s169, 128, %s172, %s155
        $region20: #{tpu_custom_call.1} parent=15 // pred_fallthru
          _
        // Predicated region
        $region21: #{tpu_custom_call.1} parent=15 // pred_check
          %p175 = pneg %p98
        $region22: #{tpu_custom_call.1} parent=15 // pred_check_branch
          %177 = sbr.rel (%p175) target = $region24
        $region23: #{tpu_custom_call.1} parent=15 // pred_region
          %s178 = sand.u32 %s88, 1
          %s179 = scalar_lea.sflag [#allocation8], %s178
          %s180 = sand.u32 %s88, 1
          %s181 = smul.addr %s180, 2
          %s182 = scalar_lea.vmem [#allocation7], %s181
          %s183 = sadd.s32 %s25, %s26
          %p184 = scmp.lt.s32.totalorder %s183, 0
          %s185 = scalar_select %p184, %s183, 0
          %s186 = smul.u32 2, %s185
          %s188 = ssub.s32 32, 32
          %189 = vsyncadd %s179, %s188
          %s190 = smul.addr %s24, 2
          %s191 = sadd.s32 %s186, %s190
          %s192 = smul.addr %s191, 16
          %s193 = scalar_lea.hbm %s1, %s192
          %s195 = sshll.u32 %s182, 4
          %s196 = int_to_ptr.vmem [resolvable:$true] %s195
          %198 = dma.hbm_to_vmem [thread:$0]  %s193, 32, %s196, %s179
        $region24: #{tpu_custom_call.1} parent=15 // pred_fallthru
          _
      $region16: #{tpu_custom_call.1} parent=5 // pred_fallthru
        _
      %p199 = scmp.le.s32.totalorder 1, %s17
      %p200 = scmp.lt.s32.totalorder %s17, 3
      %p201 = pnand %p199, %p200
      %p202 = pneg %p201
      // Predicated region
      $region25: #{tpu_custom_call.1} parent=5 // pred_check
        _
      $region26: #{tpu_custom_call.1} parent=5 // pred_check_branch
        %204 = sbr.rel (%p201) target = $region28
      $region27: #{tpu_custom_call.1} parent=5 // pred_region
        %s205 = ssub.s32 %s17, 1
        %s206 = sand.u32 %s57, 1
        %s207 = scalar_lea.sflag [#allocation5], %s206
        %s208 = sand.u32 %s57, 1
        %s209 = smul.addr %s208, 8
        %s210 = scalar_lea.vmem [#allocation4], %s209
        // Predicated region
        $region29: #{tpu_custom_call.1} parent=27 // pred_check
          %p211 = pneg %p70
        $region30: #{tpu_custom_call.1} parent=27 // pred_check_branch
          %213 = sbr.rel (%p211) target = $region32
        $region31: #{tpu_custom_call.1} parent=27 // pred_region
          %214 = dma.done %s207, 128
        $region32: #{tpu_custom_call.1} parent=27 // pred_fallthru
          _
        %s215 = sand.u32 %s91, 1
        %s216 = scalar_lea.sflag [#allocation8], %s215
        %s217 = sand.u32 %s91, 1
        %s218 = smul.addr %s217, 2
        %s219 = scalar_lea.vmem [#allocation7], %s218
        // Predicated region
        $region33: #{tpu_custom_call.1} parent=27 // pred_check
          %p220 = pneg %p104
        $region34: #{tpu_custom_call.1} parent=27 // pred_check_branch
          %222 = sbr.rel (%p220) target = $region36
        $region35: #{tpu_custom_call.1} parent=27 // pred_region
          %223 = dma.done %s216, 32
        $region36: #{tpu_custom_call.1} parent=27 // pred_fallthru
          _
        %s224 = sand.u32 %s57, 1
        %s225 = scalar_lea.sflag [#allocation5], %s224
        %s226 = sand.u32 %s57, 1
        %s227 = smul.addr %s226, 8
        %s228 = scalar_lea.vmem [#allocation4], %s227
        %p229 = pneg %p70
        %p230 = pneg %p67
        %s231 = sand.u32 %s91, 1
        %s232 = scalar_lea.sflag [#allocation8], %s231
        %s233 = sand.u32 %s91, 1
        %s234 = smul.addr %s233, 2
        %s235 = scalar_lea.vmem [#allocation7], %s234
        %p236 = pneg %p104
        %p237 = pneg %p101
        %p238 = pneg %p132
        %p239 = pneg %p129
        %s240 = sand.u32 %s119, 1
        %s241 = scalar_lea.sflag [#allocation6], %s240
        %s242 = sand.u32 %s119, 1
        %s243 = scalar_lea.vmem [#allocation9], %s242
        %s244 = sadd.s32 %s28, %s29
        %p245 = scmp.lt.s32.totalorder %s244, 0
        %s246 = scalar_select %p245, %s244, 0
        %s247 = smul.u32 2, %s246
        %s248 = sadd.s32 %s28, %s29
        %p249 = scmp.lt.s32.totalorder %s248, 0
        %s250 = scalar_select %p249, %s248, 0
        %s251 = smul.u32 2, %s250
        %p252 = scmp.eq.s32.totalorder %s29, 0
        // Predicated region
        $region37: #{tpu_custom_call.1} parent=27 // pred_check
          %p253 = pneg %p252
        $region38: #{tpu_custom_call.1} parent=27 // pred_check_branch
          %255 = sbr.rel (%p253) target = $region40
        $region39: #{tpu_custom_call.1} parent=27 // pred_region
          %v256 = vlaneseq
          %vm257 = vcmp.ge.s32.totalorder %v256, 0
          %vm258 = vcmp.lt.s32.totalorder %v256, 256
          %vm259 = vmand %vm257, %vm258
          %260 = vst.msk [vmem:[#allocation2] sm:$0x3] %vm259, 0.0
          %261 = vst.msk [vmem:[#allocation3] sm:$0x3] %vm259, 0.0
        $region40: #{tpu_custom_call.1} parent=27 // pred_fallthru
          _
        %v262 = vld [vmem:[%s210] sm:$0xff]
        %v263 = vld [vmem:[%s219] sm:$0x3]
        %v265 = vcombine.high %v262, %v262
        %vm267 = vcmask 1043456
        %v268 = vsel %vm267, %v262, -inf
        %v269 = vrot.slane %v268, 4
        %v270 = vmax.f32 %v268, %v269
        %v271 = vrot.slane %v270, 2
        %v272 = vmax.f32 %v270, %v271
        %v273 = vrot.slane %v272, 1
        %v274 = vmax.f32 %v272, %v273
        %v275 = vsel %vm267, %v265, -inf
        %v276 = vrot.slane %v275, 4
        %v277 = vmax.f32 %v275, %v276
        %v278 = vrot.slane %v277, 2
        %v279 = vmax.f32 %v277, %v278
        %v280 = vrot.slane %v279, 1
        %v281 = vmax.f32 %v279, %v280
        %v284 = vcombine.low %v274, %v281
        %v286 = vsub.f32 %v262, %v284
        %v287 = vmul.f32 %v286, 1.442695
        %v288 = vpow.pop %v287
        %v290 = vcombine.high %v288, %v288
        %v292 = vsel %vm267, %v288, 0.0
        %v293 = vrot.slane %v292, 4
        %v294 = vadd.f32 %v292, %v293
        %v295 = vrot.slane %v294, 2
        %v296 = vadd.f32 %v294, %v295
        %v297 = vrot.slane %v296, 1
        %v298 = vadd.f32 %v296, %v297
        %v299 = vsel %vm267, %v290, 0.0
        %v300 = vrot.slane %v299, 4
        %v301 = vadd.f32 %v299, %v300
        %v302 = vrot.slane %v301, 2
        %v303 = vadd.f32 %v301, %v302
        %v304 = vrot.slane %v303, 1
        %v305 = vadd.f32 %v303, %v304
        %v306 = vlog2.pop %v298
        %v307 = vmul.f32 %v306, 0.6931472
        %v308 = vlog2.pop %v305
        %v309 = vmul.f32 %v308, 0.6931472
        %v310 = vadd.f32 %v274, %v307
        %v311 = vadd.f32 %v281, %v309
        %v312 = vlaneseq
        %v313 = vshrl.u32 %v312, 7
        %vm314 = vcmp.eq.s32.totalorder %v263, 255
        %v315 = vsel %vm314, 0, %v263
        %v316 = vlaneseq
        %v317 = vshrl.u32 %v316, 7
        %v318 = vsub.s32 0, %v317
        %v319 = vrot.slane %v315, %v318
        %v320 = vlaneseq
        %v321 = vshrl.u32 %v320, 7
        %v322 = vsub.s32 1, %v321
        %v323 = vrot.slane %v315, %v322
        %vm324 = vcmp.eq.s32.totalorder %v313, %v319
        %vm325 = vcmp.eq.s32.totalorder %v313, %v323
        %v326 = vsel %vm324, 0.9, 0.005
        %v327 = vsel %vm325, 0.9, 0.005
        %v328 = vmul.f32 %v326, %v262
        %v329 = vmul.f32 %v327, %v265
        %v330 = vsel %vm267, %v328, 0.0
        %v331 = vrot.slane %v330, 4
        %v332 = vadd.f32 %v330, %v331
        %v333 = vrot.slane %v332, 2
        %v334 = vadd.f32 %v332, %v333
        %v335 = vrot.slane %v334, 1
        %v336 = vadd.f32 %v334, %v335
        %v337 = vsel %vm267, %v329, 0.0
        %v338 = vrot.slane %v337, 4
        %v339 = vadd.f32 %v337, %v338
        %v340 = vrot.slane %v339, 2
        %v341 = vadd.f32 %v339, %v340
        %v342 = vrot.slane %v341, 1
        %v343 = vadd.f32 %v341, %v342
        %v344 = vmul.f32 %v310, 0.915
        %v345 = vmul.f32 %v311, 0.915
        %v346 = vsub.f32 %v344, %v336
        %v347 = vsub.f32 %v345, %v343
        %s348 = sadd.s32 %s28, %s29
        %v349 = vlaneseq
        %v350 = vand.u32 %v349, 127
        %v351 = vadd.s32 %v350, 128
        %s352 = smul.u32 %s348, 256
        %v353 = vstv %s352
        %v354 = vadd.s32 %v350, %v353
        %v355 = vadd.s32 %v351, %v353
        %vm356 = vcmp.ne.s32.totalorder %v263, 255
        %vm357 = vcmp.lt.s32.totalorder %v354, 256
        %vm358 = vcmp.lt.s32.totalorder %v355, 256
        %v359 = vsel %vm357, 1, 0
        %v360 = vsel %vm358, 1, 0
        %v361 = vcombine.low %v359, %v360
        %v363 = vunpack.c.l.s4 1966171168
        %v364 = vunpack.c.0.s8 %v363
        %v365 = vlaneseq
        %v366 = vshrl.u32 %v365, 7
        %v367 = vsub.s32 %v364, %v366
        %v368 = vrot.slane %v361, %v367
        %v370 = vunpack.c.l.s4 1966171168
        %v371 = vunpack.c.0.s8 %v370
        %v372 = vlaneseq
        %v373 = vshrl.u32 %v372, 7
        %v374 = vsub.s32 %v371, %v373
        %v375 = vrot.slane %v368, %v374
        %vm376 = vcmp.ne.s32.totalorder %v375, 0
        %vm377 = vmand %vm356, %vm376
        %v378 = vld [vmem:[#allocation2] sm:$0x3]
        %v381 = vcombine.low %v346, %v347
        %v383 = vunpack.c.l.s4 1966171168
        %v384 = vunpack.c.0.s8 %v383
        %v385 = vlaneseq
        %v386 = vshrl.u32 %v385, 7
        %v387 = vsub.s32 %v384, %v386
        %v388 = vrot.slane %v381, %v387
        %v390 = vunpack.c.l.s4 1966171168
        %v391 = vunpack.c.0.s8 %v390
        %v392 = vlaneseq
        %v393 = vshrl.u32 %v392, 7
        %v394 = vsub.s32 %v391, %v393
        %v395 = vrot.slane %v388, %v394
        %v397 = vsel %vm377, %v395, 0.0
        %v398 = vadd.f32 %v378, %v397
        %v399 = vlaneseq
        %vm400 = vcmp.ge.s32.totalorder %v399, 0
        %vm401 = vcmp.lt.s32.totalorder %v399, 256
        %vm402 = vmand %vm400, %vm401
        %403 = vst.msk [vmem:[#allocation2] sm:$0x3] %vm402, %v398
        %v404 = vld [vmem:[#allocation3] sm:$0x3]
        %v405 = vsel %vm377, 1.0, 0.0
        %v406 = vadd.f32 %v404, %v405
        %407 = vst.msk [vmem:[#allocation3] sm:$0x3] %vm402, %v406
        // Predicated region
        $region41: #{tpu_custom_call.1} parent=27 // pred_check
          %p408 = pneg %p252
        $region42: #{tpu_custom_call.1} parent=27 // pred_check_branch
          %410 = sbr.rel (%p408) target = $region44
        $region43: #{tpu_custom_call.1} parent=27 // pred_region
          %v411 = vld [vmem:[#allocation2] sm:$0x3]
          %v413 = vlaneseq
          %v414 = vshrl.u32 %v413, 7
          %v415 = vsub.s32 0, %v414
          %v416 = vrot.slane %v411, %v415
          %v417 = vlaneseq
          %v418 = vshrl.u32 %v417, 7
          %v419 = vsub.s32 1, %v418
          %v420 = vrot.slane %v411, %v419
          %vm423 = vcmask 1040384
          %v424 = vsel %vm423, %v416, 0.0
          %v425 = vsel %vm423, %v420, 0.0
          %v426 = vadd.f32 %v424, %v425
          %427 = vadd.xlane.f32.xlu0 %v426
          %v428 = vpop.xlane.xlu0 %427
          %v429 = vld [vmem:[#allocation3] sm:$0x3]
          %v431 = vlaneseq
          %v432 = vshrl.u32 %v431, 7
          %v433 = vsub.s32 0, %v432
          %v434 = vrot.slane %v429, %v433
          %v435 = vlaneseq
          %v436 = vshrl.u32 %v435, 7
          %v437 = vsub.s32 1, %v436
          %v438 = vrot.slane %v429, %v437
          %v441 = vsel %vm423, %v434, 0.0
          %v442 = vsel %vm423, %v438, 0.0
          %v443 = vadd.f32 %v441, %v442
          %444 = vadd.xlane.f32.xlu0 %v443
          %v445 = vpop.xlane.xlu0 %444
          %vm446 = vcmp.eq.s32.totalorder %v350, 0
          %vm447 = vcmp.eq.s32.totalorder %v350, 1
          %v448 = vsel %vm447, %v445, 0.0
          %v449 = vsel %vm446, %v428, %v448
          %450 = vst [vmem:[%s243] sm:$0x1] %v449
        $region44: #{tpu_custom_call.1} parent=27 // pred_fallthru
          _
        %s451 = sand.u32 %s119, 1
        %s452 = scalar_lea.sflag [#allocation6], %s451
        %s453 = sand.u32 %s119, 1
        %s454 = scalar_lea.vmem [#allocation9], %s453
        // Predicated region
        $region45: #{tpu_custom_call.1} parent=27 // pred_check
          %p455 = pneg %p129
        $region46: #{tpu_custom_call.1} parent=27 // pred_check_branch
          %457 = sbr.rel (%p455) target = $region48
        $region47: #{tpu_custom_call.1} parent=27 // pred_region
          %s459 = ssub.s32 16, 16
          %460 = vsyncadd %s452, %s459
          %s461 = sadd.s32 %s28, %s27
          %s462 = smul.addr %s461, 16
          %s463 = scalar_lea.hbm %s2, %s462
          %s465 = sshll.u32 %s454, 4
          %s466 = int_to_ptr.vmem [resolvable:$true] %s465
          %468 = dma.vmem_to_hbm [thread:$0]  %s466, 16, %s463, %s452
        $region48: #{tpu_custom_call.1} parent=27 // pred_fallthru
          _
      $region28: #{tpu_custom_call.1} parent=5 // pred_fallthru
        _
      %p469 = scmp.le.s32.totalorder 2, %s17
      // Predicated region
      $region49: #{tpu_custom_call.1} parent=5 // pred_check
        %p470 = pneg %p469
      $region50: #{tpu_custom_call.1} parent=5 // pred_check_branch
        %472 = sbr.rel (%p470) target = $region52
      $region51: #{tpu_custom_call.1} parent=5 // pred_region
        %s473 = ssub.s32 %s17, 2
        // Predicated region
        $region53: #{tpu_custom_call.1} parent=51 // pred_check
          %p474 = pneg %p135
        $region54: #{tpu_custom_call.1} parent=51 // pred_check_branch
          %476 = sbr.rel (%p474) target = $region56
        $region55: #{tpu_custom_call.1} parent=51 // pred_region
          %s477 = sand.u32 %s120, 1
          %s478 = scalar_lea.sflag [#allocation6], %s477
          %s479 = sand.u32 %s120, 1
          %s480 = scalar_lea.vmem [#allocation9], %s479
          %481 = dma.done %s478, 16
        $region56: #{tpu_custom_call.1} parent=51 // pred_fallthru
          _
      $region52: #{tpu_custom_call.1} parent=5 // pred_fallthru
        _
    $region6: #{tpu_custom_call.1} parent=1 // loop_footer
      %s21 = sadd.s32 1, %s17
    $region7: #{tpu_custom_call.1} parent=1 // loop_footer_branch
      %16 = sbr.rel target = $region3
    $region8: #{tpu_custom_call.1} parent=1 // loop_exit
      _
    %482 = vsyncpa [#allocation5], 1
    %s483 = scalar_lea.sflag [#allocation5], 1
    %484 = vsyncpa %s483, 1
    %485 = vsyncpa [#allocation8], 1
    %s486 = scalar_lea.sflag [#allocation8], 1
    %487 = vsyncpa %s486, 1
    %488 = vsyncpa [#allocation6], 1
    %s489 = scalar_lea.sflag [#allocation6], 1
    %490 = vsyncpa %s489, 1

</llo_original>
